<compile_context>
chip_gen: v7x
topology: tpu7x:2x2x1
jax: 0.10.0
libtpu: 0.0.40
codegen_flags: <defaults>
</compile_context>

<pallas_src>
import functools

import jax
import jax.numpy as jnp
from jax.experimental import pallas as pl
from jax.experimental.pallas import tpu as pltpu


_LANES = 128           # vreg lane width: last dim of every tile
_MAX_BLOCK_ROWS = 2048  # 2048 * 128 * 4B = 1 MiB per input tile (per buffer)


# ----------------------------------- kernel ----------------------------------

def _iou_partial_kernel(pr_ref, gt_ref, out_ref, *, threshold):
    """Per-block partial sums: [sum(gt*pr), sum(gt), sum(pr)] reduced over
    sublanes only (lane-dense (1, 3, 128) output)."""
    pr = pr_ref[...]                      # (tm, 128) float32
    gt = gt_ref[...]                      # (tm, 128) float32

    if threshold is not None:             # static (trace-time) branch
        pr = (pr > threshold).astype(jnp.float32)

    inter_l = jnp.sum(gt * pr, axis=0, keepdims=True)   # (1, 128)
    gt_l = jnp.sum(gt, axis=0, keepdims=True)            # (1, 128)
    pr_l = jnp.sum(pr, axis=0, keepdims=True)            # (1, 128)

    out_ref[...] = jnp.concatenate([inter_l, gt_l, pr_l], axis=0)[None, :, :]


# ---------------------------------- wrapper -----------------------------------

def iou_loss(y_pr, y_gt, *, eps=1e-07, threshold=0.5, ignore_channels=None):
    """Pallas implementation of IoU.forward: 1 - iou(y_pr, y_gt).

    y_pr, y_gt: NCHW (or any same-shape) float arrays.  Returns an f32 scalar.
    activation=None (identity) is assumed, matching the module default.
    """
    # TODO(synk): non-identity activations (sigmoid/softmax2d/logsoftmax/tanh)
    # are not lowered into the kernel; the module default activation=None is
    # what is implemented here.
    if ignore_channels is not None:
        channels = [c for c in range(y_pr.shape[1]) if c not in ignore_channels]
        idx = jnp.asarray(channels, dtype=jnp.int32)
        y_pr = jnp.take(y_pr, idx, axis=1)
        y_gt = jnp.take(y_gt, idx, axis=1)

    pr = y_pr.reshape(-1).astype(jnp.float32)
    gt = y_gt.reshape(-1).astype(jnp.float32)

    total = pr.shape[0]
    rows = -(-total // _LANES)                       # ceil-div
    tm = min(_MAX_BLOCK_ROWS, ((rows + 7) // 8) * 8)  # multiple of 8 sublanes
    rows_padded = -(-rows // tm) * tm
    pad = rows_padded * _LANES - total
    if pad:
        pr = jnp.pad(pr, (0, pad))
        gt = jnp.pad(gt, (0, pad))

    pr2 = pr.reshape(rows_padded, _LANES)
    gt2 = gt.reshape(rows_padded, _LANES)
    num_blocks = rows_padded // tm

    kernel = functools.partial(_iou_partial_kernel, threshold=threshold)
    partials = pl.pallas_call(
        kernel,
        out_shape=jax.ShapeDtypeStruct((num_blocks, 3, _LANES), jnp.float32),
        grid=(num_blocks,),
        in_specs=[
            pl.BlockSpec((tm, _LANES), lambda i: (i, 0)),
            pl.BlockSpec((tm, _LANES), lambda i: (i, 0)),
        ],
        out_specs=pl.BlockSpec((1, 3, _LANES), lambda i: (i, 0, 0)),
        compiler_params=pltpu.CompilerParams(
            dimension_semantics=("parallel",),
            vmem_limit_bytes=32 * 1024 * 1024,
        ),
    )(pr2, gt2)

    # Tiny epilogue in plain JAX: reduce per-block lane partials, apply eps.
    sums = jnp.sum(partials, axis=(0, 2))            # (3,)
    intersection, s_gt, s_pr = sums[0], sums[1], sums[2]
    union = s_gt + s_pr - intersection + eps
    return 1.0 - (intersection + eps) / union


# ----------------------------- pure-JAX reference -----------------------------

def _ref_iou_loss(y_pr, y_gt, *, eps=1e-07, threshold=0.5):
    pr = y_pr.astype(jnp.float32)
    gt = y_gt.astype(jnp.float32)
    if threshold is not None:
        pr = (pr > threshold).astype(jnp.float32)
    intersection = jnp.sum(gt * pr)
    union = jnp.sum(gt) + jnp.sum(pr) - intersection + eps
    return 1.0 - (intersection + eps) / union


# ------------------------------------ main ------------------------------------

if __name__ == "__main__":
    key = jax.random.PRNGKey(0)
    k1, k2 = jax.random.split(key)
    N, C, H, W = 2, 4, 16, 16  # small NCHW shapes consistent with the module
    y_pr = jax.random.uniform(k1, (N, C, H, W), dtype=jnp.float32)
    y_gt = (jax.random.uniform(k2, (N, C, H, W)) > 0.5).astype(jnp.float32)

    loss = jax.jit(iou_loss)(y_pr, y_gt)
    loss = jax.block_until_ready(loss)

    ref = _ref_iou_loss(y_pr, y_gt)
    assert jnp.allclose(loss, ref, rtol=1e-5, atol=1e-6), (loss, ref)
    print("KERNEL_OK")
</pallas_src>

<mosaic_0001>
module attributes {stable_mosaic.version = 11 : i64} {
  func.func @_iou_partial_kernel(%arg0: i32, %arg1: memref<16x128xf32, #tpu.memory_space<vmem>>, %arg2: memref<16x128xf32, #tpu.memory_space<vmem>>, %arg3: memref<1x3x128xf32, #tpu.memory_space<vmem>>) attributes {dimension_semantics = [#tpu.dimension_semantics<parallel>], iteration_bounds = array<i64: 1>, scalar_prefetch = 0 : i64, scratch_operands = 0 : i64, tpu.core_type = #tpu.core_type<tc>, window_params = [{transform_indices = @transform_0, window_bounds = array<i64: 16, 128>}, {transform_indices = @transform_1, window_bounds = array<i64: 16, 128>}, {transform_indices = @transform_2, window_bounds = array<i64: 1, 3, 128>}]} {
    %c0 = arith.constant 0 : index
    %c0_0 = arith.constant 0 : index
    %0 = vector.load %arg1[%c0, %c0_0] : memref<16x128xf32, #tpu.memory_space<vmem>>, vector<16x128xf32>
    %c0_1 = arith.constant 0 : index
    %c0_2 = arith.constant 0 : index
    %1 = vector.load %arg2[%c0_1, %c0_2] : memref<16x128xf32, #tpu.memory_space<vmem>>, vector<16x128xf32>
    %cst = arith.constant 5.000000e-01 : f32
    %2 = vector.broadcast %cst : f32 to vector<16x128xf32>
    %3 = arith.cmpf ogt, %0, %2 : vector<16x128xf32>
    %4 = arith.extui %3 : vector<16x128xi1> to vector<16x128xi32>
    %5 = arith.sitofp %4 : vector<16x128xi32> to vector<16x128xf32>
    %6 = arith.mulf %1, %5 : vector<16x128xf32>
    %cst_3 = arith.constant dense<0.000000e+00> : vector<128xf32>
    %7 = vector.multi_reduction <add>, %6, %cst_3 [0] : vector<16x128xf32> to vector<128xf32>
    %8 = vector.shape_cast %7 : vector<128xf32> to vector<1x128xf32>
    %cst_4 = arith.constant dense<0.000000e+00> : vector<128xf32>
    %9 = vector.multi_reduction <add>, %1, %cst_4 [0] : vector<16x128xf32> to vector<128xf32>
    %10 = vector.shape_cast %9 : vector<128xf32> to vector<1x128xf32>
    %cst_5 = arith.constant dense<0.000000e+00> : vector<128xf32>
    %11 = vector.multi_reduction <add>, %5, %cst_5 [0] : vector<16x128xf32> to vector<128xf32>
    %12 = vector.shape_cast %11 : vector<128xf32> to vector<1x128xf32>
    %13 = tpu.concatenate %8, %10, %12 in 0 : vector<1x128xf32>, vector<1x128xf32>, vector<1x128xf32> -> vector<3x128xf32>
    %14 = vector.shape_cast %13 : vector<3x128xf32> to vector<1x3x128xf32>
    %c0_6 = arith.constant 0 : index
    %c0_7 = arith.constant 0 : index
    %c0_8 = arith.constant 0 : index
    %15 = vector.load %arg3[%c0_6, %c0_7, %c0_8] : memref<1x3x128xf32, #tpu.memory_space<vmem>>, vector<1x3x128xf32>
    tpu.vector_store %arg3[%c0_6, %c0_7, %c0_8], %14 {strides = array<i32>} : memref<1x3x128xf32, #tpu.memory_space<vmem>>, vector<1x3x128xf32>,
    return
  }
  func.func @transform_0(%arg0: i32) -> (i32, i32) {
    %c0_i32 = arith.constant 0 : i32
    %c0_i32_0 = arith.constant 0 : i32
    return %arg0, %c0_i32 : i32, i32
  }
  func.func @transform_1(%arg0: i32) -> (i32, i32) {
    %c0_i32 = arith.constant 0 : i32
    %c0_i32_0 = arith.constant 0 : i32
    return %arg0, %c0_i32 : i32, i32
  }
  func.func @transform_2(%arg0: i32) -> (i32, i32, i32) {
    %c0_i32 = arith.constant 0 : i32
    %c0_i32_0 = arith.constant 0 : i32
    %c0_i32_1 = arith.constant 0 : i32
    return %arg0, %c0_i32, %c0_i32_0 : i32, i32, i32
  }
}

</mosaic_0001>

<llo_original>
// kernel: iou_loss.1
$region0: #{iou_loss.1}
  #allocation0 [shape = 'u32[]', space=smem, size = 0x4, offset = 0x4, fixed_abs, tag = 'smem constant byte address 0x4 - core index']
  #allocation1 [shape = 'u32[144,128]{1,0:T(1,128)}', space=vmem, size = 0x12000, scoped, tag = 'internal scratch']
  %s0 = inlined_call_operand.vmem [shape: f32[16,128], index: 0, kind: input, shape index: {}]
  %s1 = inlined_call_operand.vmem [shape: f32[16,128], index: 1, kind: input, shape index: {}]
  %s2 = inlined_call_operand.vmem [shape: f32[1,3,128], index: 2, kind: output, shape index: {}]
  %s3 = sld [smem:[#allocation0]]
  $region18: #{iou_loss.1} parent=0
    _
  %s5 = ssub.s32 1, %s3
  %s6 = scalar_select 0, %s5, %s3
  // Predicated region
  $region2: #{iou_loss.1} parent=0 // pred_check
    _
  $region3: #{iou_loss.1} parent=0 // pred_check_branch
    %8 = sbr.rel (0) target = $region5
  $region4: #{iou_loss.1} parent=0 // pred_region
    _
  $region5: #{iou_loss.1} parent=0 // pred_fallthru
    _
  // Predicated region
  $region6: #{iou_loss.1} parent=0 // pred_check
    _
  $region7: #{iou_loss.1} parent=0 // pred_check_branch
    %10 = sbr.rel (0) target = $region9
  $region8: #{iou_loss.1} parent=0 // pred_region
    _
  $region9: #{iou_loss.1} parent=0 // pred_fallthru
    _
  %v11 = vld [vmem:[%s0] sm:$0xff]
  %v12 = vld [vmem:[%s0 + $0x8] sm:$0xff]
  %v13 = vld [vmem:[%s1] sm:$0xff]
  %v14 = vld [vmem:[%s1 + $0x8] sm:$0xff]
  %vm15 = vcmp.gt.f32.partialorder %v11, 0.5
  %vm16 = vcmp.gt.f32.partialorder %v12, 0.5
  %v17 = vsel %vm15, 1, 0
  %v18 = vsel %vm16, 1, 0
  %v19 = vcvt.s32.f32 %v17
  %v20 = vcvt.s32.f32 %v18
  %v21 = vmul.f32 %v13, %v19
  %v22 = vmul.f32 %v14, %v20
  %v23 = vadd.f32 %v21, %v22
  %v24 = vrot.slane %v23, 4
  %v25 = vadd.f32 %v23, %v24
  %v26 = vrot.slane %v25, 2
  %v27 = vadd.f32 %v25, %v26
  %v28 = vrot.slane %v27, 1
  %v29 = vadd.f32 %v27, %v28
  %v30 = vadd.f32 %v13, %v14
  %v31 = vrot.slane %v30, 4
  %v32 = vadd.f32 %v30, %v31
  %v33 = vrot.slane %v32, 2
  %v34 = vadd.f32 %v32, %v33
  %v35 = vrot.slane %v34, 1
  %v36 = vadd.f32 %v34, %v35
  %v37 = vadd.f32 %v19, %v20
  %v38 = vrot.slane %v37, 4
  %v39 = vadd.f32 %v37, %v38
  %v40 = vrot.slane %v39, 2
  %v41 = vadd.f32 %v39, %v40
  %v42 = vrot.slane %v41, 1
  %v43 = vadd.f32 %v41, %v42
  %vm44 = vcmask 1040384
  %v45 = vsel %vm44, %v29, %v36
  %vm46 = vcmask 1041408
  %v47 = vsel %vm46, %v45, %v43
  %48 = vst [vmem:[%s2] sm:$0x7] %v47
  // Predicated region
  $region10: #{iou_loss.1} parent=0 // pred_check
    _
  $region11: #{iou_loss.1} parent=0 // pred_check_branch
    %50 = sbr.rel (0) target = $region13
  $region12: #{iou_loss.1} parent=0 // pred_region
    _
  $region13: #{iou_loss.1} parent=0 // pred_fallthru
    _
  // Predicated region
  $region14: #{iou_loss.1} parent=0 // pred_check
    _
  $region15: #{iou_loss.1} parent=0 // pred_check_branch
    %52 = sbr.rel (0) target = $region17
  $region16: #{iou_loss.1} parent=0 // pred_region
    _
  $region17: #{iou_loss.1} parent=0 // pred_fallthru
    _

</llo_original>
